<compile_context>
chip_gen: v6e
topology: v6e:2x2x1
jax: 0.10.0
libtpu: 0.0.40
codegen_flags: <defaults>
</compile_context>

<pallas_src>
import jax
import jax.numpy as jnp
from jax.experimental import pallas as pl
from jax.experimental.pallas import tpu as pltpu


_LANE = 1024               # 8 * 128: wide lane-dense rows
_TARGET_BLOCK_ROWS = 512   # 512 x 1024 f32 = 2 MiB per block per array


def _scalar_scale_kernel(scale_ref, x_ref, o_ref):
    # scale_ref: f32[1] in SMEM -> scalar register, broadcast-multiplied on the VPU.
    s = scale_ref[0]
    o_ref[...] = (x_ref[...] * s).astype(o_ref.dtype)


def scalar_scale(x: jax.Array, scale: jax.Array) -> jax.Array:
    """y = x * scale (scale has shape (1,)), matching ScalarScale.forward."""
    orig_shape = x.shape
    orig_dtype = x.dtype
    n_elem = x.size

    # Flatten to a lane-dense 2-D slab (rows, 1024). Pad only if necessary.
    pad = (-n_elem) % _LANE
    x_flat = x.reshape(-1)
    if pad:
        x_flat = jnp.pad(x_flat, (0, pad))
    rows = (n_elem + pad) // _LANE
    x2d = x_flat.reshape(rows, _LANE)

    # Big blocks: the whole array when small, else 2 MiB slabs (multiple of 8 rows;
    # any remainder block is handled by Pallas' masked partial tile).
    if rows <= _TARGET_BLOCK_ROWS:
        block_rows = rows                  # block == full extent (always legal)
    else:
        block_rows = _TARGET_BLOCK_ROWS
    grid = (pl.cdiv(rows, block_rows),)

    scale_smem = scale.reshape(-1)[:1].astype(jnp.float32)

    out2d = pl.pallas_call(
        _scalar_scale_kernel,
        out_shape=jax.ShapeDtypeStruct((rows, _LANE), orig_dtype),
        grid_spec=pltpu.PrefetchScalarGridSpec(
            num_scalar_prefetch=0,
            grid=grid,
            in_specs=[
                pl.BlockSpec(memory_space=pltpu.MemorySpace.SMEM),   # f32[1] scale
                pl.BlockSpec((block_rows, _LANE), lambda i: (i, 0)),
            ],
            out_specs=pl.BlockSpec((block_rows, _LANE), lambda i: (i, 0)),
        ),
        compiler_params=pltpu.CompilerParams(
            dimension_semantics=("parallel",),
        ),
    )(scale_smem, x2d)

    out_flat = out2d.reshape(-1)
    if pad:
        out_flat = out_flat[:n_elem]
    return out_flat.reshape(orig_shape)


if __name__ == "__main__":
    key = jax.random.PRNGKey(0)
    # NCHW input, small shapes (N=2, C=4, H=W=16) -> 2048 elements (lane-aligned, no pad).
    x = jax.random.normal(key, (2, 4, 16, 16), dtype=jnp.float32)

    # Deterministic parameter init: nn.Parameter(torch.zeros(1)) -> zeros.
    scale = jnp.zeros((1,), dtype=jnp.float32)

    y = scalar_scale(x, scale)
    jax.block_until_ready(y)
    assert y.shape == x.shape and y.dtype == x.dtype
    assert jnp.allclose(y, x * scale[0])

    # Nonzero scale.
    scale2 = jnp.array([1.5], dtype=jnp.float32)
    y2 = scalar_scale(x, scale2)
    jax.block_until_ready(y2)
    assert jnp.allclose(y2, x * 1.5, rtol=1e-6, atol=1e-6)

    # Non-lane-aligned shape exercises the padding path.
    x3 = jax.random.normal(jax.random.PRNGKey(1), (3, 5, 7), dtype=jnp.float32)
    y3 = scalar_scale(x3, scale2)
    jax.block_until_ready(y3)
    assert y3.shape == x3.shape
    assert jnp.allclose(y3, x3 * 1.5, rtol=1e-6, atol=1e-6)

    print("KERNEL_OK")
</pallas_src>

<mosaic_0001>
module attributes {stable_mosaic.version = 11 : i64} {
  func.func @_scalar_scale_kernel(%arg0: i32, %arg1: memref<1xf32, #tpu.memory_space<smem>>, %arg2: memref<2x1024xf32, #tpu.memory_space<vmem>>, %arg3: memref<2x1024xf32, #tpu.memory_space<vmem>>) attributes {dimension_semantics = [#tpu.dimension_semantics<parallel>], iteration_bounds = array<i64: 1>, scalar_prefetch = 0 : i64, scratch_operands = 0 : i64, tpu.core_type = #tpu.core_type<tc>, window_params = [{transform_indices = @transform_0, window_bounds = array<i64: 1>}, {transform_indices = @transform_1, window_bounds = array<i64: 2, 1024>}, {transform_indices = @transform_2, window_bounds = array<i64: 2, 1024>}]} {
    %c0 = arith.constant 0 : index
    %0 = memref.load %arg1[%c0] : memref<1xf32, #tpu.memory_space<smem>>
    %c0_0 = arith.constant 0 : index
    %c0_1 = arith.constant 0 : index
    %1 = vector.load %arg2[%c0_0, %c0_1] : memref<2x1024xf32, #tpu.memory_space<vmem>>, vector<2x1024xf32>
    %2 = vector.broadcast %0 : f32 to vector<2x1024xf32>
    %3 = arith.mulf %1, %2 : vector<2x1024xf32>
    %c0_2 = arith.constant 0 : index
    %c0_3 = arith.constant 0 : index
    %4 = vector.load %arg3[%c0_2, %c0_3] : memref<2x1024xf32, #tpu.memory_space<vmem>>, vector<2x1024xf32>
    tpu.vector_store %arg3[%c0_2, %c0_3], %3 {strides = array<i32>} : memref<2x1024xf32, #tpu.memory_space<vmem>>, vector<2x1024xf32>,
    return
  }
  func.func @transform_0(%arg0: i32) -> i32 {
    %c0_i32 = arith.constant 0 : i32
    %c0_i32_0 = arith.constant 0 : i32
    return %c0_i32 : i32
  }
  func.func @transform_1(%arg0: i32) -> (i32, i32) {
    %c0_i32 = arith.constant 0 : i32
    %c0_i32_0 = arith.constant 0 : i32
    return %arg0, %c0_i32 : i32, i32
  }
  func.func @transform_2(%arg0: i32) -> (i32, i32) {
    %c0_i32 = arith.constant 0 : i32
    %c0_i32_0 = arith.constant 0 : i32
    return %arg0, %c0_i32 : i32, i32
  }
}

</mosaic_0001>

<llo_original>
// kernel: tpu_custom_call.1
$region0: #{tpu_custom_call.1}
  #allocation0 [shape = 'u32[]', space=smem, size = 0x4, offset = 0x4, fixed_abs, tag = 'smem constant byte address 0x4 - core index']
  #allocation1 [shape = 'u32[144,128]{1,0:T(1,128)}', space=vmem, size = 0x12000, scoped, tag = 'internal scratch']
  #allocation2 [shape = 'f32[1]{0:T(128)S(6)}', space=smem, size = 0x200, scoped, tag = 'scoped memory for tpu_custom_call.1']
  %s0 = inlined_call_operand.<no memory space> [shape: f32[1], index: 0, kind: input, shape index: {}]
  %s1 = inlined_call_operand.hbm [shape: f32[2,1024], index: 1, kind: input, shape index: {}]
  %s2 = inlined_call_operand.hbm [shape: f32[2,1024], index: 2, kind: output, shape index: {}]
  %s3 = sld [smem:[#allocation0]]
  $region22: #{tpu_custom_call.1} parent=0
    _
  %s5 = ssub.s32 1, %s3
  %s6 = scalar_select 0, %s5, %s3
  %7 = sst [smem:[#allocation2]] %s0
  $region1: #{tpu_custom_call.1} parent=0
    #allocation3 [shape = 'u8[8192]{0}', space=vmem, size = 0x2000, scoped, tag = 'input window, operand 1, single buffered']
    #allocation4 [shape = 's32[1]{0}', space=sflag, size = 0x4, scoped, tag = 'scoped memory for tpu_custom_call.1']
    #allocation5 [shape = 's32[1]{0}', space=sflag, size = 0x4, scoped, tag = 'scoped memory for tpu_custom_call.1']
    #allocation6 [shape = 'u8[8192]{0}', space=vmem, size = 0x2000, scoped, tag = 'output window, operand 0, single buffered']
    %8 = vsyncpa [#allocation4], 0
    %9 = vsyncpa [#allocation5], 0
    // Predicated region
    $region2: #{tpu_custom_call.1} parent=1 // pred_check
      _
    $region3: #{tpu_custom_call.1} parent=1 // pred_check_branch
      %11 = sbr.rel (0) target = $region5
    $region4: #{tpu_custom_call.1} parent=1 // pred_region
      _
    $region5: #{tpu_custom_call.1} parent=1 // pred_fallthru
      _
    // Predicated region
    $region6: #{tpu_custom_call.1} parent=1 // pred_check
      _
    $region7: #{tpu_custom_call.1} parent=1 // pred_check_branch
      %13 = sbr.rel (0) target = $region9
    $region8: #{tpu_custom_call.1} parent=1 // pred_region
      %s15 = ssub.s32 256, 256
      %16 = vsyncadd [#allocation4], %s15
      %s18 = sshll.u32 [#allocation3], 4
      %s19 = int_to_ptr.vmem [resolvable:$true] %s18
      %21 = dma.hbm_to_vmem [thread:$0]  %s1, 256, %s19, [#allocation4]
    $region9: #{tpu_custom_call.1} parent=1 // pred_fallthru
      _
    // Predicated region
    $region10: #{tpu_custom_call.1} parent=1 // pred_check
      _
    $region11: #{tpu_custom_call.1} parent=1 // pred_check_branch
      %23 = sbr.rel (0) target = $region13
    $region12: #{tpu_custom_call.1} parent=1 // pred_region
      %24 = dma.done [#allocation4], 256
    $region13: #{tpu_custom_call.1} parent=1 // pred_fallthru
      _
    %s25 = sld [smem:[#allocation2]]
    %v26 = vld [vmem:[#allocation3] sm:$0xff]
    %v27 = vld [vmem:[#allocation3 + $0x8] sm:$0xff]
    %v28 = vstv %s25
    %v29 = vmul.f32 %v26, %v28
    %v30 = vmul.f32 %v27, %v28
    %31 = vst [vmem:[#allocation6] sm:$0xff] %v29
    %32 = vst [vmem:[#allocation6 + $0x8] sm:$0xff] %v30
    // Predicated region
    $region14: #{tpu_custom_call.1} parent=1 // pred_check
      _
    $region15: #{tpu_custom_call.1} parent=1 // pred_check_branch
      %34 = sbr.rel (0) target = $region17
    $region16: #{tpu_custom_call.1} parent=1 // pred_region
      %s36 = ssub.s32 256, 256
      %37 = vsyncadd [#allocation5], %s36
      %s39 = sshll.u32 [#allocation6], 4
      %s40 = int_to_ptr.vmem [resolvable:$true] %s39
      %42 = dma.vmem_to_hbm [thread:$0]  %s40, 256, %s2, [#allocation5]
    $region17: #{tpu_custom_call.1} parent=1 // pred_fallthru
      _
    // Predicated region
    $region18: #{tpu_custom_call.1} parent=1 // pred_check
      _
    $region19: #{tpu_custom_call.1} parent=1 // pred_check_branch
      %44 = sbr.rel (0) target = $region21
    $region20: #{tpu_custom_call.1} parent=1 // pred_region
      %45 = dma.done [#allocation5], 256
    $region21: #{tpu_custom_call.1} parent=1 // pred_fallthru
      _
    %46 = vsyncpa [#allocation4], 1
    %47 = vsyncpa [#allocation5], 1

</llo_original>
